<compile_context>
chip_gen: v5e
topology: v5e:2x2
jax: 0.10.0
libtpu: 0.0.40
codegen_flags: <defaults>
</compile_context>

<pallas_src>
import jax
import jax.numpy as jnp
from jax.experimental import pallas as pl
from jax.experimental.pallas import tpu as pltpu

_LANES = 128
_TARGET_BLOCK_BYTES = 1 << 20  # ~1 MiB per input block


def ddpm_noise_kernel(scales_ref, x_ref, eta_ref, o_ref):
    """o = sqrt(abar_t) * x0 + sqrt(1 - abar_t) * eta  (per-batch scales)."""
    x = x_ref[...].astype(jnp.float32)
    e = eta_ref[...].astype(jnp.float32)
    sa = scales_ref[:, :, 0:1]           # (block_b, 1, 1) -> broadcast
    sb = scales_ref[:, :, 1:2]           # (block_b, 1, 1) -> broadcast
    o_ref[...] = (sa * x + sb * e).astype(o_ref.dtype)


def _sublane_multiple(itemsize):
    """Rows per dense vreg: 8 for 32-bit, 16 for bf16, 32 for 8-bit dtypes."""
    return max(8, 32 // max(itemsize, 1))


def _padded_layout(chw, itemsize):
    """Pad flattened per-batch length to a multiple of sub_mult*128 lanes."""
    sub = _sublane_multiple(itemsize)
    tile = sub * _LANES
    chw_pad = ((chw + tile - 1) // tile) * tile
    return chw_pad, chw_pad // _LANES, sub


class DDPMPallas:
    """Pallas re-implementation of DDPM.forward (the noising process)."""
    # TODO(synk): `backward` (eta_pred = network(x, t)) depends on an external
    # network module and is out of scope for this kernel.

    def __init__(self, n_steps=1000, min_beta=0.0001, max_beta=1.0,
                 image_chw=(4, 22, 22), min_pallas_bytes=1 << 18):
        self.n_steps = n_steps
        self.image_chw = image_chw
        self.min_pallas_bytes = min_pallas_bytes
        betas = jnp.linspace(min_beta, max_beta, n_steps, dtype=jnp.float32)
        alphas = 1.0 - betas
        self.alpha_bars = jnp.cumprod(alphas)          # (n_steps,) f32

    def __call__(self, x0, t, eta):
        B, C, H, W = x0.shape
        chw = C * H * W
        itemsize = jnp.dtype(x0.dtype).itemsize

        # Per-batch scales (B scalars; negligible glue work).
        abar = self.alpha_bars[t].astype(jnp.float32)            # (B,)
        sa = jnp.sqrt(abar)
        sb = jnp.sqrt(1.0 - abar)

        # Tiny problems: the fused 2-op XLA expression beats any kernel launch.
        if 2 * B * chw * itemsize < self.min_pallas_bytes:
            sa4 = sa.reshape(B, 1, 1, 1).astype(jnp.float32)
            sb4 = sb.reshape(B, 1, 1, 1).astype(jnp.float32)
            return (sa4 * x0.astype(jnp.float32)
                    + sb4 * eta.astype(jnp.float32)).astype(x0.dtype)

        chw_pad, S, sub = _padded_layout(chw, itemsize)
        slab_bytes = S * _LANES * itemsize

        if slab_bytes >= _TARGET_BLOCK_BYTES and S > sub:
            # Large images: one batch element per block, chunk rows into
            # ~1 MiB pieces (row count a multiple of the sublane packing).
            block_b = 1
            rows = (_TARGET_BLOCK_BYTES // (_LANES * itemsize)) // sub * sub
            block_s = max(sub, min(S, rows))
            if B == 1 and S >= 2 * sub:
                # Keep >= 2 row chunks so v7x's 2nd TensorCore has work.
                half = ((pl.cdiv(S, 2) + sub - 1) // sub) * sub
                block_s = min(block_s, half)
        else:
            # Small images: pack several batch elements into one block.
            block_s = S
            block_b = max(1, min(B, _TARGET_BLOCK_BYTES // max(slab_bytes, 1)))
            if B >= 2:
                # Keep >= 2 batch blocks so v7x's 2nd TensorCore has work.
                block_b = min(block_b, pl.cdiv(B, 2))

        grid = (pl.cdiv(B, block_b), pl.cdiv(S, block_s))

        # One tiny packed-scale array: [:, :, 0] = sqrt(abar), [:, :, 1] = sqrt(1-abar).
        scales = jnp.stack([sa, sb], axis=-1).reshape(B, 1, 2)   # (B, 1, 2) f32

        # Row-major flatten, pad the trailing lanes, view as (B, S, 128).
        xf = x0.reshape(B, chw)
        ef = eta.reshape(B, chw)
        if chw_pad != chw:
            pad = ((0, 0), (0, chw_pad - chw))
            xf = jnp.pad(xf, pad)
            ef = jnp.pad(ef, pad)
        xf = xf.reshape(B, S, _LANES)
        ef = ef.reshape(B, S, _LANES)

        img_spec = pl.BlockSpec((block_b, block_s, _LANES),
                                lambda bi, si: (bi, si, 0))
        scale_spec = pl.BlockSpec((block_b, 1, 2), lambda bi, si: (bi, 0, 0))

        out = pl.pallas_call(
            ddpm_noise_kernel,
            out_shape=jax.ShapeDtypeStruct((B, S, _LANES), x0.dtype),
            grid=grid,
            in_specs=[scale_spec, img_spec, img_spec],
            out_specs=img_spec,
            compiler_params=pltpu.CompilerParams(
                dimension_semantics=("parallel", "parallel")),
        )(scales, xf, ef)

        out = out.reshape(B, chw_pad)[:, :chw]
        return out.reshape(B, C, H, W)


def _reference(ddpm, x0, t, eta):
    B = x0.shape[0]
    abar = ddpm.alpha_bars[t].reshape(B, 1, 1, 1).astype(jnp.float32)
    ref = (jnp.sqrt(abar) * x0.astype(jnp.float32)
           + jnp.sqrt(1.0 - abar) * eta.astype(jnp.float32))
    return ref


if __name__ == "__main__":
    key = jax.random.PRNGKey(0)
    k_x, k_eta, k_t, k_x2, k_eta2, k_t2 = jax.random.split(key, 6)
    n_steps = 1000

    # --- Test 1: f32, lane-aligned C*H*W (4*16*16 = 1024), kernel path forced.
    B, C, H, W = 2, 4, 16, 16
    x0 = jax.random.normal(k_x, (B, C, H, W), dtype=jnp.float32)
    eta = jax.random.normal(k_eta, (B, C, H, W), dtype=jnp.float32)
    t = jax.random.randint(k_t, (B,), 0, n_steps, dtype=jnp.int32)

    ddpm = DDPMPallas(n_steps=n_steps, min_beta=0.0001, max_beta=1.0,
                      image_chw=(C, H, W), min_pallas_bytes=0)
    noised = jax.block_until_ready(ddpm(x0, t, eta))
    ref = _reference(ddpm, x0, t, eta)
    assert noised.shape == (B, C, H, W)
    assert jnp.allclose(noised, ref, atol=1e-6, rtol=1e-6)

    # --- Test 2: odd C*H*W (module default 4*22*22 = 1936) -> padded slab path.
    C2, H2, W2 = 4, 22, 22
    x0b = jax.random.normal(k_x2, (B, C2, H2, W2), dtype=jnp.float32)
    etab = jax.random.normal(k_eta2, (B, C2, H2, W2), dtype=jnp.float32)
    tb = jax.random.randint(k_t2, (B,), 0, n_steps, dtype=jnp.int32)

    ddpm_odd = DDPMPallas(n_steps=n_steps, min_beta=0.0001, max_beta=1.0,
                          image_chw=(C2, H2, W2), min_pallas_bytes=0)
    noised_b = jax.block_until_ready(ddpm_odd(x0b, tb, etab))
    ref_b = _reference(ddpm_odd, x0b, tb, etab)
    assert noised_b.shape == (B, C2, H2, W2)
    assert jnp.allclose(noised_b, ref_b, atol=1e-6, rtol=1e-6)

    # --- Test 3: bf16 I/O (halves HBM traffic; math stays f32 in-kernel).
    x0h = x0.astype(jnp.bfloat16)
    etah = eta.astype(jnp.bfloat16)
    noised_h = jax.block_until_ready(ddpm(x0h, t, etah))
    ref_h = _reference(ddpm, x0h, t, etah)
    assert noised_h.dtype == jnp.bfloat16
    assert jnp.allclose(noised_h.astype(jnp.float32), ref_h, atol=0.1, rtol=0.1)

    print("KERNEL_OK")
</pallas_src>

<mosaic_0001>
module attributes {stable_mosaic.version = 11 : i64} {
  func.func @ddpm_noise_kernel(%arg0: i32, %arg1: i32, %arg2: memref<1x1x2xf32, #tpu.memory_space<vmem>>, %arg3: memref<1x8x128xf32, #tpu.memory_space<vmem>>, %arg4: memref<1x8x128xf32, #tpu.memory_space<vmem>>, %arg5: memref<1x8x128xf32, #tpu.memory_space<vmem>>) attributes {dimension_semantics = [#tpu.dimension_semantics<parallel>, #tpu.dimension_semantics<parallel>], iteration_bounds = array<i64: 2, 1>, scalar_prefetch = 0 : i64, scratch_operands = 0 : i64, tpu.core_type = #tpu.core_type<tc>, window_params = [{transform_indices = @transform_0, window_bounds = array<i64: 1, 1, 2>}, {transform_indices = @transform_1, window_bounds = array<i64: 1, 8, 128>}, {transform_indices = @transform_2, window_bounds = array<i64: 1, 8, 128>}, {transform_indices = @transform_3, window_bounds = array<i64: 1, 8, 128>}]} {
    %c0 = arith.constant 0 : index
    %c0_0 = arith.constant 0 : index
    %c0_1 = arith.constant 0 : index
    %0 = vector.load %arg3[%c0, %c0_0, %c0_1] : memref<1x8x128xf32, #tpu.memory_space<vmem>>, vector<1x8x128xf32>
    %c0_2 = arith.constant 0 : index
    %c0_3 = arith.constant 0 : index
    %c0_4 = arith.constant 0 : index
    %1 = vector.load %arg4[%c0_2, %c0_3, %c0_4] : memref<1x8x128xf32, #tpu.memory_space<vmem>>, vector<1x8x128xf32>
    %c0_5 = arith.constant 0 : index
    %c0_6 = arith.constant 0 : index
    %c0_7 = arith.constant 0 : index
    %2 = vector.load %arg2[%c0_5, %c0_6, %c0_7] : memref<1x1x2xf32, #tpu.memory_space<vmem>>, vector<1x1x1xf32>
    %c0_8 = arith.constant 0 : index
    %c0_9 = arith.constant 0 : index
    %c1 = arith.constant 1 : index
    %3 = vector.load %arg2[%c0_8, %c0_9, %c1] : memref<1x1x2xf32, #tpu.memory_space<vmem>>, vector<1x1x1xf32>
    %4 = vector.broadcast %2 : vector<1x1x1xf32> to vector<1x8x128xf32>
    %5 = arith.mulf %4, %0 : vector<1x8x128xf32>
    %6 = vector.broadcast %3 : vector<1x1x1xf32> to vector<1x8x128xf32>
    %7 = arith.mulf %6, %1 : vector<1x8x128xf32>
    %8 = arith.addf %5, %7 : vector<1x8x128xf32>
    %c0_10 = arith.constant 0 : index
    %c0_11 = arith.constant 0 : index
    %c0_12 = arith.constant 0 : index
    %9 = vector.load %arg5[%c0_10, %c0_11, %c0_12] : memref<1x8x128xf32, #tpu.memory_space<vmem>>, vector<1x8x128xf32>
    tpu.vector_store %arg5[%c0_10, %c0_11, %c0_12], %8 {strides = array<i32>} : memref<1x8x128xf32, #tpu.memory_space<vmem>>, vector<1x8x128xf32>,
    return
  }
  func.func @transform_0(%arg0: i32, %arg1: i32) -> (i32, i32, i32) {
    %c0_i32 = arith.constant 0 : i32
    %c0_i32_0 = arith.constant 0 : i32
    %c0_i32_1 = arith.constant 0 : i32
    return %arg0, %c0_i32, %c0_i32_0 : i32, i32, i32
  }
  func.func @transform_1(%arg0: i32, %arg1: i32) -> (i32, i32, i32) {
    %c0_i32 = arith.constant 0 : i32
    %c0_i32_0 = arith.constant 0 : i32
    return %arg0, %arg1, %c0_i32 : i32, i32, i32
  }
  func.func @transform_2(%arg0: i32, %arg1: i32) -> (i32, i32, i32) {
    %c0_i32 = arith.constant 0 : i32
    %c0_i32_0 = arith.constant 0 : i32
    return %arg0, %arg1, %c0_i32 : i32, i32, i32
  }
  func.func @transform_3(%arg0: i32, %arg1: i32) -> (i32, i32, i32) {
    %c0_i32 = arith.constant 0 : i32
    %c0_i32_0 = arith.constant 0 : i32
    return %arg0, %arg1, %c0_i32 : i32, i32, i32
  }
}

</mosaic_0001>

<llo_original>
// kernel: tpu_custom_call.1
$region0: #{tpu_custom_call.1}
  #allocation0 [shape = 'u32[]', space=smem, size = 0x4, offset = 0x4, fixed_abs, tag = 'smem constant byte address 0x4 - core index']
  #allocation1 [shape = 'u32[72,128]{1,0:T(1,128)}', space=vmem, size = 0x9000, scoped, tag = 'internal scratch']
  %s0 = inlined_call_operand.hbm [shape: f32[2,1,2], index: 0, kind: input, shape index: {}]
  %s1 = inlined_call_operand.hbm [shape: f32[2,8,128], index: 1, kind: input, shape index: {}]
  %s2 = inlined_call_operand.hbm [shape: f32[2,8,128], index: 2, kind: input, shape index: {}]
  %s3 = inlined_call_operand.hbm [shape: f32[2,8,128], index: 3, kind: output, shape index: {}]
  %s4 = sld [smem:[#allocation0]]
  $region57: #{tpu_custom_call.1} parent=0
    _
  %s6 = ssub.s32 1, %s4
  %s7 = scalar_select 0, %s6, %s4
  $region1: #{tpu_custom_call.1} parent=0
    #allocation2 [shape = 'u8[1024]{0}', space=vmem, size = 0x400, scoped, tag = 'input window, operand 0']
    #allocation3 [shape = 's32[2]{0}', space=sflag, size = 0x8, scoped, tag = 'scoped memory for tpu_custom_call.1']
    #allocation4 [shape = 's32[2]{0}', space=sflag, size = 0x8, scoped, tag = 'scoped memory for tpu_custom_call.1']
    #allocation5 [shape = 'u8[8192]{0}', space=vmem, size = 0x2000, scoped, tag = 'input window, operand 1']
    #allocation6 [shape = 's32[2]{0}', space=sflag, size = 0x8, scoped, tag = 'scoped memory for tpu_custom_call.1']
    #allocation7 [shape = 'u8[8192]{0}', space=vmem, size = 0x2000, scoped, tag = 'input window, operand 2']
    #allocation8 [shape = 'u8[8192]{0}', space=vmem, size = 0x2000, scoped, tag = 'output window, operand 0']
    %8 = vsyncpa [#allocation3], 0
    %s9 = scalar_lea.sflag [#allocation3], 1
    %10 = vsyncpa %s9, 0
    %11 = vsyncpa [#allocation6], 0
    %s12 = scalar_lea.sflag [#allocation6], 1
    %13 = vsyncpa %s12, 0
    %14 = vsyncpa [#allocation4], 0
    %s15 = scalar_lea.sflag [#allocation4], 1
    %16 = vsyncpa %s15, 0
    loop: start=0, step=1, limit=4
    $region2: #{tpu_custom_call.1} parent=1 // loop_pre_header
      _
    $region3: #{tpu_custom_call.1} parent=1 // loop_header
      %s18 = sphi 0, %s22
      %p19 = scmp.ge.s32.totalorder %s18, 4
      %s25 = sphi 0, %s37
      %s26 = sphi 0, %s33
      %s27 = sphi 0, %s25
      %s28 = sphi 0, %s26
      %s29 = sphi 0, %s27
      %s30 = sphi 0, %s28
      %s40 = sphi 0, %s42
      %s43 = sphi 0, %s40
      %s44 = sphi 0, %s43
      %s60 = sphi 0, %s44
      %s68 = sphi 0, %s70
      %s71 = sphi 0, %s68
      %s72 = sphi 0, %s71
      %s88 = sphi 0, %s72
      %s96 = sphi 0, %s98
      %s99 = sphi 0, %s96
      %s100 = sphi 0, %s99
      %s116 = sphi 0, %s100
      %s124 = sphi 0, %s126
      %s127 = sphi 0, %s124
      %s128 = sphi 0, %s127
      %s144 = sphi 0, %s128
    $region4: #{tpu_custom_call.1} parent=1 // loop_header_branch
      %21 = sbr.rel (%p19) target = $region8
    $region5: #{tpu_custom_call.1} parent=1 // loop_body
      %s23 = ssub.s32 %s18, 1
      %s24 = ssub.s32 %s18, 2
      %s31 = sadd.s32 1, %s26
      %p32 = scmp.ge.s32.totalorder %s31, 1
      %s33 = scalar_select %p32, 0, %s31
      %s34 = sadd.s32 1, %s25
      %s35 = scalar_select %p32, %s34, %s25
      %p36 = scmp.ge.s32.totalorder %s35, 2
      %s37 = scalar_select %p36, 0, %s35
      %s38 = ssub.s32 %s25, %s37
      %p39 = scmp.eq.s32.totalorder %s38, 0
      %s41 = sadd.s32 %s40, 1
      %s42 = scalar_select %p39, %s40, %s41
      %p45 = pneg %p39
      %p46 = scmp.eq.s32.totalorder %s18, 1
      %p47 = por %p45, %p46
      %p48 = scmp.ne.s32.totalorder %s40, %s43
      %p49 = scmp.eq.s32.totalorder %s18, 0
      %p50 = por %p48, %p49
      %p51 = scmp.ne.s32.totalorder %s40, %s43
      %p52 = scmp.eq.s32.totalorder %s23, 1
      %p53 = por %p51, %p52
      %p54 = scmp.ne.s32.totalorder %s43, %s44
      %p55 = scmp.eq.s32.totalorder %s23, 0
      %p56 = por %p54, %p55
      %p57 = scmp.ne.s32.totalorder %s43, %s44
      %p58 = scmp.eq.s32.totalorder %s24, 1
      %p59 = por %p57, %p58
      %p61 = scmp.ne.s32.totalorder %s44, %s60
      %p62 = scmp.eq.s32.totalorder %s24, 0
      %p63 = por %p61, %p62
      %s64 = ssub.s32 %s25, %s37
      %s65 = ssub.s32 %s26, %s33
      %s66 = sor.u32 %s64, %s65
      %p67 = scmp.eq.s32.totalorder %s66, 0
      %s69 = sadd.s32 %s68, 1
      %s70 = scalar_select %p67, %s68, %s69
      %p73 = pneg %p67
      %p74 = scmp.eq.s32.totalorder %s18, 1
      %p75 = por %p73, %p74
      %p76 = scmp.ne.s32.totalorder %s68, %s71
      %p77 = scmp.eq.s32.totalorder %s18, 0
      %p78 = por %p76, %p77
      %p79 = scmp.ne.s32.totalorder %s68, %s71
      %p80 = scmp.eq.s32.totalorder %s23, 1
      %p81 = por %p79, %p80
      %p82 = scmp.ne.s32.totalorder %s71, %s72
      %p83 = scmp.eq.s32.totalorder %s23, 0
      %p84 = por %p82, %p83
      %p85 = scmp.ne.s32.totalorder %s71, %s72
      %p86 = scmp.eq.s32.totalorder %s24, 1
      %p87 = por %p85, %p86
      %p89 = scmp.ne.s32.totalorder %s72, %s88
      %p90 = scmp.eq.s32.totalorder %s24, 0
      %p91 = por %p89, %p90
      %s92 = ssub.s32 %s25, %s37
      %s93 = ssub.s32 %s26, %s33
      %s94 = sor.u32 %s92, %s93
      %p95 = scmp.eq.s32.totalorder %s94, 0
      %s97 = sadd.s32 %s96, 1
      %s98 = scalar_select %p95, %s96, %s97
      %p101 = pneg %p95
      %p102 = scmp.eq.s32.totalorder %s18, 1
      %p103 = por %p101, %p102
      %p104 = scmp.ne.s32.totalorder %s96, %s99
      %p105 = scmp.eq.s32.totalorder %s18, 0
      %p106 = por %p104, %p105
      %p107 = scmp.ne.s32.totalorder %s96, %s99
      %p108 = scmp.eq.s32.totalorder %s23, 1
      %p109 = por %p107, %p108
      %p110 = scmp.ne.s32.totalorder %s99, %s100
      %p111 = scmp.eq.s32.totalorder %s23, 0
      %p112 = por %p110, %p111
      %p113 = scmp.ne.s32.totalorder %s99, %s100
      %p114 = scmp.eq.s32.totalorder %s24, 1
      %p115 = por %p113, %p114
      %p117 = scmp.ne.s32.totalorder %s100, %s116
      %p118 = scmp.eq.s32.totalorder %s24, 0
      %p119 = por %p117, %p118
      %s120 = ssub.s32 %s25, %s37
      %s121 = ssub.s32 %s26, %s33
      %s122 = sor.u32 %s120, %s121
      %p123 = scmp.eq.s32.totalorder %s122, 0
      %s125 = sadd.s32 %s124, 1
      %s126 = scalar_select %p123, %s124, %s125
      %p129 = pneg %p123
      %p130 = scmp.eq.s32.totalorder %s18, 1
      %p131 = por %p129, %p130
      %p132 = scmp.ne.s32.totalorder %s124, %s127
      %p133 = scmp.eq.s32.totalorder %s18, 0
      %p134 = por %p132, %p133
      %p135 = scmp.ne.s32.totalorder %s124, %s127
      %p136 = scmp.eq.s32.totalorder %s23, 1
      %p137 = por %p135, %p136
      %p138 = scmp.ne.s32.totalorder %s127, %s128
      %p139 = scmp.eq.s32.totalorder %s23, 0
      %p140 = por %p138, %p139
      %p141 = scmp.ne.s32.totalorder %s127, %s128
      %p142 = scmp.eq.s32.totalorder %s24, 1
      %p143 = por %p141, %p142
      %p145 = scmp.ne.s32.totalorder %s128, %s144
      %p146 = scmp.eq.s32.totalorder %s24, 0
      %p147 = por %p145, %p146
      %p148 = scmp.le.s32.totalorder 1, %s18
      %p149 = scmp.lt.s32.totalorder %s18, 3
      %p150 = pnand %p148, %p149
      %p151 = pneg %p150
      // Predicated region
      $region9: #{tpu_custom_call.1} parent=5 // pred_check
        _
      $region10: #{tpu_custom_call.1} parent=5 // pred_check_branch
        %153 = sbr.rel (%p150) target = $region12
      $region11: #{tpu_custom_call.1} parent=5 // pred_region
        %s154 = ssub.s32 %s18, 1
      $region12: #{tpu_custom_call.1} parent=5 // pred_fallthru
        _
      %p155 = scmp.lt.s32.totalorder %s18, 2
      // Predicated region
      $region13: #{tpu_custom_call.1} parent=5 // pred_check
        %p156 = pneg %p155
      $region14: #{tpu_custom_call.1} parent=5 // pred_check_branch
        %158 = sbr.rel (%p156) target = $region16
      $region15: #{tpu_custom_call.1} parent=5 // pred_region
        // Predicated region
        $region17: #{tpu_custom_call.1} parent=15 // pred_check
          %p159 = pneg %p50
        $region18: #{tpu_custom_call.1} parent=15 // pred_check_branch
          %161 = sbr.rel (%p159) target = $region20
        $region19: #{tpu_custom_call.1} parent=15 // pred_region
          %s162 = sand.u32 %s40, 1
          %s163 = scalar_lea.sflag [#allocation3], %s162
          %s164 = sand.u32 %s40, 1
          %s165 = scalar_lea.vmem [#allocation2], %s164
          %167 = vsyncadd %s163, 0
          %s168 = scalar_lea.hbm %s0, %s25
          %s170 = sshll.u32 %s168, 4
          %s171 = int_to_ptr.hbm [resolvable:$true] %s170
          %s172 = sshll.u32 %s165, 4
          %s173 = int_to_ptr.vmem [resolvable:$true] %s172
          %175 = dma.hbm_to_vmem [thread:$0]  %s171, 16, %s173, %s163
        $region20: #{tpu_custom_call.1} parent=15 // pred_fallthru
          _
        // Predicated region
        $region21: #{tpu_custom_call.1} parent=15 // pred_check
          %p176 = pneg %p78
        $region22: #{tpu_custom_call.1} parent=15 // pred_check_branch
          %178 = sbr.rel (%p176) target = $region24
        $region23: #{tpu_custom_call.1} parent=15 // pred_region
          %s179 = sand.u32 %s18, 1
          %s180 = scalar_lea.sflag [#allocation6], %s179
          %s181 = sand.u32 %s68, 1
          %s182 = smul.addr %s181, 8
          %s183 = scalar_lea.vmem [#allocation5], %s182
          %185 = vsyncadd %s180, 0
          %s186 = sadd.s32 %s26, %s25
          %s187 = smul.addr %s186, 8
          %s188 = scalar_lea.hbm %s1, %s187
          %s190 = sshll.u32 %s188, 4
          %s191 = int_to_ptr.hbm [resolvable:$true] %s190
          %s192 = sshll.u32 %s183, 4
          %s193 = int_to_ptr.vmem [resolvable:$true] %s192
          %195 = dma.hbm_to_vmem [thread:$0]  %s191, 128, %s193, %s180
        $region24: #{tpu_custom_call.1} parent=15 // pred_fallthru
          _
        // Predicated region
        $region25: #{tpu_custom_call.1} parent=15 // pred_check
          %p196 = pneg %p106
        $region26: #{tpu_custom_call.1} parent=15 // pred_check_branch
          %198 = sbr.rel (%p196) target = $region28
        $region27: #{tpu_custom_call.1} parent=15 // pred_region
          %s199 = sand.u32 %s18, 1
          %s200 = scalar_lea.sflag [#allocation6], %s199
          %s201 = sand.u32 %s96, 1
          %s202 = smul.addr %s201, 8
          %s203 = scalar_lea.vmem [#allocation7], %s202
          %205 = vsyncadd %s200, 0
          %s206 = sadd.s32 %s26, %s25
          %s207 = smul.addr %s206, 8
          %s208 = scalar_lea.hbm %s2, %s207
          %s210 = sshll.u32 %s208, 4
          %s211 = int_to_ptr.hbm [resolvable:$true] %s210
          %s212 = sshll.u32 %s203, 4
          %s213 = int_to_ptr.vmem [resolvable:$true] %s212
          %215 = dma.hbm_to_vmem [thread:$0]  %s211, 128, %s213, %s200
        $region28: #{tpu_custom_call.1} parent=15 // pred_fallthru
          _
      $region16: #{tpu_custom_call.1} parent=5 // pred_fallthru
        _
      %p216 = scmp.le.s32.totalorder 1, %s18
      %p217 = scmp.lt.s32.totalorder %s18, 3
      %p218 = pnand %p216, %p217
      %p219 = pneg %p218
      // Predicated region
      $region29: #{tpu_custom_call.1} parent=5 // pred_check
        _
      $region30: #{tpu_custom_call.1} parent=5 // pred_check_branch
        %221 = sbr.rel (%p218) target = $region32
      $region31: #{tpu_custom_call.1} parent=5 // pred_region
        %s222 = ssub.s32 %s18, 1
        %s223 = sand.u32 %s43, 1
        %s224 = scalar_lea.sflag [#allocation3], %s223
        %s225 = sand.u32 %s43, 1
        %s226 = scalar_lea.vmem [#allocation2], %s225
        // Predicated region
        $region33: #{tpu_custom_call.1} parent=31 // pred_check
          %p227 = pneg %p56
        $region34: #{tpu_custom_call.1} parent=31 // pred_check_branch
          %229 = sbr.rel (%p227) target = $region36
        $region35: #{tpu_custom_call.1} parent=31 // pred_region
          %231 = dma.done %s224, 16
        $region36: #{tpu_custom_call.1} parent=31 // pred_fallthru
          _
        %s232 = sand.u32 %s23, 1
        %s233 = scalar_lea.sflag [#allocation6], %s232
        %s234 = sand.u32 %s71, 1
        %s235 = smul.addr %s234, 8
        %s236 = scalar_lea.vmem [#allocation5], %s235
        // Predicated region
        $region37: #{tpu_custom_call.1} parent=31 // pred_check
          %p237 = pneg %p84
        $region38: #{tpu_custom_call.1} parent=31 // pred_check_branch
          %239 = sbr.rel (%p237) target = $region40
        $region39: #{tpu_custom_call.1} parent=31 // pred_region
          %241 = dma.done %s233, 128
        $region40: #{tpu_custom_call.1} parent=31 // pred_fallthru
          _
        %s242 = sand.u32 %s23, 1
        %s243 = scalar_lea.sflag [#allocation6], %s242
        %s244 = sand.u32 %s99, 1
        %s245 = smul.addr %s244, 8
        %s246 = scalar_lea.vmem [#allocation7], %s245
        // Predicated region
        $region41: #{tpu_custom_call.1} parent=31 // pred_check
          %p247 = pneg %p112
        $region42: #{tpu_custom_call.1} parent=31 // pred_check_branch
          %249 = sbr.rel (%p247) target = $region44
        $region43: #{tpu_custom_call.1} parent=31 // pred_region
          %251 = dma.done %s243, 128
        $region44: #{tpu_custom_call.1} parent=31 // pred_fallthru
          _
        %s252 = sand.u32 %s43, 1
        %s253 = scalar_lea.sflag [#allocation3], %s252
        %s254 = sand.u32 %s43, 1
        %s255 = scalar_lea.vmem [#allocation2], %s254
        %p256 = pneg %p56
        %p257 = pneg %p53
        %s258 = sand.u32 %s23, 1
        %s259 = scalar_lea.sflag [#allocation6], %s258
        %s260 = sand.u32 %s71, 1
        %s261 = smul.addr %s260, 8
        %s262 = scalar_lea.vmem [#allocation5], %s261
        %p263 = pneg %p84
        %p264 = pneg %p81
        %s265 = sand.u32 %s23, 1
        %s266 = scalar_lea.sflag [#allocation6], %s265
        %s267 = sand.u32 %s99, 1
        %s268 = smul.addr %s267, 8
        %s269 = scalar_lea.vmem [#allocation7], %s268
        %p270 = pneg %p112
        %p271 = pneg %p109
        %p272 = pneg %p140
        %p273 = pneg %p137
        %s274 = sand.u32 %s127, 1
        %s275 = scalar_lea.sflag [#allocation4], %s274
        %s276 = sand.u32 %s127, 1
        %s277 = smul.addr %s276, 8
        %s278 = scalar_lea.vmem [#allocation8], %s277
        %v279 = vld [vmem:[%s236] sm:$0xff]
        %v280 = vld [vmem:[%s246] sm:$0xff]
        %v281 = vld [vmem:[%s226] sm:$0x1]
        %v283 = vperm.slane %v281, 0
        %284 = vset.pattern.permute.xlu0 0
        %285 = vperm.xlu0 %284, %v283
        %v286 = vpop.permute.xlu0 %285
        %v288 = vmul.f32 %v286, %v279
        %289 = vset.pattern.permute.xlu0 1
        %290 = vperm.xlu0 %289, %v283
        %v291 = vpop.permute.xlu0 %290
        %v293 = vmul.f32 %v291, %v280
        %v294 = vadd.f32 %v288, %v293
        %295 = vst [vmem:[%s278] sm:$0xff] %v294
        %s296 = sand.u32 %s127, 1
        %s297 = scalar_lea.sflag [#allocation4], %s296
        %s298 = sand.u32 %s127, 1
        %s299 = smul.addr %s298, 8
        %s300 = scalar_lea.vmem [#allocation8], %s299
        // Predicated region
        $region45: #{tpu_custom_call.1} parent=31 // pred_check
          %p301 = pneg %p137
        $region46: #{tpu_custom_call.1} parent=31 // pred_check_branch
          %303 = sbr.rel (%p301) target = $region48
        $region47: #{tpu_custom_call.1} parent=31 // pred_region
          %305 = vsyncadd %s297, 0
          %s306 = sadd.s32 %s28, %s27
          %s307 = smul.addr %s306, 8
          %s308 = scalar_lea.hbm %s3, %s307
          %s310 = sshll.u32 %s300, 4
          %s311 = int_to_ptr.vmem [resolvable:$true] %s310
          %s312 = sshll.u32 %s308, 4
          %s313 = int_to_ptr.hbm [resolvable:$true] %s312
          %315 = dma.vmem_to_hbm [thread:$0]  %s311, 128, %s313, %s297
        $region48: #{tpu_custom_call.1} parent=31 // pred_fallthru
          _
      $region32: #{tpu_custom_call.1} parent=5 // pred_fallthru
        _
      %p316 = scmp.le.s32.totalorder 2, %s18
      // Predicated region
      $region49: #{tpu_custom_call.1} parent=5 // pred_check
        %p317 = pneg %p316
      $region50: #{tpu_custom_call.1} parent=5 // pred_check_branch
        %319 = sbr.rel (%p317) target = $region52
      $region51: #{tpu_custom_call.1} parent=5 // pred_region
        %s320 = ssub.s32 %s18, 2
        // Predicated region
        $region53: #{tpu_custom_call.1} parent=51 // pred_check
          %p321 = pneg %p143
        $region54: #{tpu_custom_call.1} parent=51 // pred_check_branch
          %323 = sbr.rel (%p321) target = $region56
        $region55: #{tpu_custom_call.1} parent=51 // pred_region
          %s324 = sand.u32 %s128, 1
          %s325 = scalar_lea.sflag [#allocation4], %s324
          %s326 = sand.u32 %s128, 1
          %s327 = smul.addr %s326, 8
          %s328 = scalar_lea.vmem [#allocation8], %s327
          %330 = dma.done %s325, 128
        $region56: #{tpu_custom_call.1} parent=51 // pred_fallthru
          _
      $region52: #{tpu_custom_call.1} parent=5 // pred_fallthru
        _
    $region6: #{tpu_custom_call.1} parent=1 // loop_footer
      %s22 = sadd.s32 1, %s18
    $region7: #{tpu_custom_call.1} parent=1 // loop_footer_branch
      %17 = sbr.rel target = $region3
    $region8: #{tpu_custom_call.1} parent=1 // loop_exit
      _
    %331 = vsyncpa [#allocation3], 1
    %s332 = scalar_lea.sflag [#allocation3], 1
    %333 = vsyncpa %s332, 1
    %334 = vsyncpa [#allocation6], 1
    %s335 = scalar_lea.sflag [#allocation6], 1
    %336 = vsyncpa %s335, 1
    %337 = vsyncpa [#allocation4], 1
    %s338 = scalar_lea.sflag [#allocation4], 1
    %339 = vsyncpa %s338, 1

</llo_original>
